<compile_context>
chip_gen: v5e
topology: v5e:2x2
jax: 0.10.0
libtpu: 0.0.40
codegen_flags: <defaults>
</compile_context>

<pallas_src>
import functools

import jax
import jax.numpy as jnp
from jax.experimental import pallas as pl
from jax.experimental.pallas import tpu as pltpu

_LANE = 128
_SUBLANE = 8


def _round_up(n, m):
    return ((n + m - 1) // m) * m


def _pad2(x, rows, cols):
    return jnp.pad(x, ((0, rows - x.shape[0]), (0, cols - x.shape[1])))


def _vmem_capacity_bytes():
    """Generation-aware physical VMEM size (per TensorCore)."""
    try:
        info = pltpu.get_tpu_info()
        cap = getattr(info, "vmem_capacity_bytes", None)
        if cap:
            return int(cap)
    except Exception:
        pass
    return 64 * 1024 * 1024   # conservative fallback (v7x per-core VMEM)


# ----------------------------- Pallas kernel --------------------------------

def _gin_fused_kernel(a_ref, x_ref, w_ref, b_ref, pool_ref, wfc_ref, bfc_ref,
                      out_ref, h_prev_ref, h_next_ref, *, num_classes, tile_m):
    """Grid = (layer, row_tile).  A_hat / x / pool / fc refs are VMEM-resident
    (constant index_map); w_ref/b_ref hold the current layer's packed W1,W2 /
    b1,b2 slabs; h_prev/h_next are bf16 activation scratch buffers that
    persist across grid iterations."""
    layer = pl.program_id(0)
    rt = pl.program_id(1)
    last_layer = layer == pl.num_programs(0) - 1
    last_tile = rt == pl.num_programs(1) - 1

    # Layer 0: seed the resident activation buffer with the input features.
    @pl.when((layer == 0) & (rt == 0))
    def _():
        h_prev_ref[...] = x_ref[...]

    row0 = pl.multiple_of(rt * tile_m, tile_m)

    # GINConv aggregation for this row tile: (1+eps)*x_i + sum_{j->i} x_j
    # == A_hat[rows] @ h_prev (eps folded into A_hat's diagonal).
    a_rows = a_ref[pl.ds(row0, tile_m), :]                  # (TM, N) bf16
    z = jnp.dot(a_rows, h_prev_ref[...],
                preferred_element_type=jnp.float32)          # (TM, p) f32

    # GIN MLP: Linear -> ReLU -> Linear, then the outer F.relu of GIN.forward.
    h = jnp.dot(z.astype(jnp.bfloat16), w_ref[0],
                preferred_element_type=jnp.float32) + b_ref[0:1, :]
    h = jnp.maximum(h, 0.0)
    h = jnp.dot(h.astype(jnp.bfloat16), w_ref[1],
                preferred_element_type=jnp.float32) + b_ref[1:2, :]
    h_bf = jnp.maximum(h, 0.0).astype(h_next_ref.dtype)
    h_next_ref[pl.ds(row0, tile_m), :] = h_bf

    # Hand this layer's activations to the next layer (skip after last layer).
    @pl.when(last_tile & jnp.logical_not(last_layer))
    def _():
        h_prev_ref[...] = h_next_ref[...]

    # Epilogue after the last row tile of the last layer: mean pool, fc,
    # masked (numerically stable) log_softmax.
    @pl.when(last_layer & last_tile)
    def _():
        pooled = jnp.dot(pool_ref[...], h_next_ref[...],
                         preferred_element_type=jnp.float32)
        logits = jnp.dot(pooled.astype(jnp.bfloat16), wfc_ref[...],
                         preferred_element_type=jnp.float32) + bfc_ref[...]
        lane = jax.lax.broadcasted_iota(jnp.int32, logits.shape, 1)
        logits = jnp.where(lane < num_classes, logits, -1e30)
        m = jnp.max(logits, axis=-1, keepdims=True)
        shifted = logits - m
        lse = jnp.log(jnp.sum(jnp.exp(shifted), axis=-1, keepdims=True))
        out_ref[...] = shifted - lse


# ----------------------------- wrapper ---------------------------------------

def gin_forward(x, a_hat, pool_mat, params):
    """Full fused GIN.forward in a single pallas_call."""
    n, f = x.shape
    b = pool_mat.shape[0]
    convs = params["convs"]
    num_layers = len(convs)
    hidden = convs[0][2].shape[0]
    num_classes = params["fc_w"].shape[1]

    # MXU-utilization-aware padding: 128 if the real width fits, otherwise a
    # multiple of 256 (v6e/v7x 256x256 MXU); never artificially inflate.
    width = max(f, hidden)
    p = _LANE if width <= _LANE else _round_up(width, 2 * _LANE)
    n_pad = _round_up(n, _LANE)               # lane-dense node count
    b_pad = _round_up(b, _SUBLANE)
    c_pad = _round_up(num_classes, _LANE)

    # Row-tile size over the node dimension (bounds f32 temporaries and
    # pipelines the per-layer matmul chain across tiles on large graphs).
    tile_m = 2 * _LANE if n_pad % (2 * _LANE) == 0 else _LANE
    tile_m = min(tile_m, n_pad)
    n_tiles = n_pad // tile_m

    bf16 = jnp.bfloat16
    a_p = _pad2(a_hat, n_pad, n_pad).astype(bf16)
    x_p = _pad2(x, n_pad, p).astype(bf16)
    pool_p = _pad2(pool_mat, b_pad, n_pad).astype(bf16)
    wfc_p = _pad2(params["fc_w"], p, c_pad).astype(bf16)
    bfc_p = jnp.pad(params["fc_b"],
                    (0, c_pad - num_classes)).reshape(1, c_pad).astype(jnp.float32)

    # Pack per-layer MLP weights/biases into single streamed slabs.
    w_s = jnp.stack([jnp.stack([_pad2(w1, p, p), _pad2(w2, p, p)])
                     for (w1, _, w2, _) in convs]).astype(bf16)       # (L,2,p,p)
    b_s = jnp.stack([jnp.stack([jnp.pad(b1, (0, p - b1.shape[0])),
                                jnp.pad(b2, (0, p - b2.shape[0]))])
                     for (_, b1, _, b2) in convs]).astype(jnp.float32)  # (L,2,p)

    # VMEM accounting: resident operands + scratch + double-buffered streamed
    # slabs + f32 per-tile intermediates + output block.
    f32b, bfb = 4, 2
    resident_bytes = (
        n_pad * n_pad * bfb                 # A_hat (resident)
        + n_pad * p * bfb                   # x (resident)
        + 2 * n_pad * p * bfb               # h_prev + h_next scratch
        + b_pad * n_pad * bfb               # mean-pool matrix
        + p * c_pad * bfb + c_pad * f32b    # fc weight + bias
        + 2 * (2 * p * p * bfb)             # double-buffered streamed W1+W2
        + 2 * (2 * p * f32b)                # double-buffered streamed b1+b2
        + b_pad * c_pad * f32b              # f32 output block
        + 3 * tile_m * p * f32b             # f32 z / MLP intermediates per tile
        + tile_m * n_pad * bfb              # A_hat row-slice copy per tile
        + n_pad * p * bfb                   # loaded h_prev value per tile
    )

    vmem_cap = _vmem_capacity_bytes()
    budget = int(0.70 * vmem_cap)
    if resident_bytes > budget:
        # TODO(synk): for graphs this large, re-stream A_hat row/K-tiled from
        # HBM each layer (cheap relative to compute on v7x's 3.2 TB/s HBM)
        # instead of keeping it VMEM-resident, and fetch pool/fc only on the
        # last layer.
        raise NotImplementedError("graph too large for the resident-A_hat kernel")
    vmem_limit = max(resident_bytes + (16 << 20), 32 << 20)
    vmem_limit = int(min(vmem_limit, int(0.90 * vmem_cap)))

    resident = lambda l, r: (0, 0)

    out = pl.pallas_call(
        functools.partial(_gin_fused_kernel,
                          num_classes=num_classes, tile_m=tile_m),
        out_shape=jax.ShapeDtypeStruct((b_pad, c_pad), jnp.float32),
        grid=(num_layers, n_tiles),
        in_specs=[
            pl.BlockSpec((n_pad, n_pad), resident),            # A_hat (resident)
            pl.BlockSpec((n_pad, p), resident),                # x     (resident)
            pl.BlockSpec((None, 2, p, p), lambda l, r: (l, 0, 0, 0)),  # W1,W2
            pl.BlockSpec((None, 2, p), lambda l, r: (l, 0, 0)),        # b1,b2
            pl.BlockSpec((b_pad, n_pad), resident),            # mean-pool matrix
            pl.BlockSpec((p, c_pad), resident),                # fc weight
            pl.BlockSpec((1, c_pad), resident),                # fc bias
        ],
        out_specs=pl.BlockSpec((b_pad, c_pad), resident),
        scratch_shapes=[pltpu.VMEM((n_pad, p), bf16),          # h_prev
                        pltpu.VMEM((n_pad, p), bf16)],         # h_next
        compiler_params=pltpu.CompilerParams(
            dimension_semantics=("arbitrary", "arbitrary"),    # layer + tile dep
            vmem_limit_bytes=vmem_limit),
    )(a_p, x_p, w_s, b_s, pool_p, wfc_p, bfc_p)

    return out[:b, :num_classes]


# ----------------------------- parameter / graph setup -----------------------

def init_params(key, num_features, hidden, num_classes, num_layers=4):
    keys = jax.random.split(key, 4 * num_layers + 2)
    ki = iter(keys)
    convs = []
    in_dim = num_features
    for _ in range(num_layers):
        w1 = 0.1 * jax.random.normal(next(ki), (in_dim, hidden), jnp.float32)
        b1 = 0.1 * jax.random.normal(next(ki), (hidden,), jnp.float32)
        w2 = 0.1 * jax.random.normal(next(ki), (hidden, hidden), jnp.float32)
        b2 = 0.1 * jax.random.normal(next(ki), (hidden,), jnp.float32)
        convs.append((w1, b1, w2, b2))
        in_dim = hidden
    fc_w = 0.1 * jax.random.normal(next(ki), (hidden, num_classes), jnp.float32)
    fc_b = 0.1 * jax.random.normal(next(ki), (num_classes,), jnp.float32)
    return {"convs": convs, "fc_w": fc_w, "fc_b": fc_b}


def build_dense_graph(edge_index, batch, num_nodes, num_graphs, eps=0.0):
    """One batched dense graph: A_hat over ALL nodes of the batch (block-
    diagonal for disjoint graphs) + a mean-pool matrix, so a whole batch of
    graphs is processed in a single pallas_call."""
    src, dst = edge_index[0], edge_index[1]
    adj = jnp.zeros((num_nodes, num_nodes), jnp.float32).at[dst, src].add(1.0)
    a_hat = adj + (1.0 + eps) * jnp.eye(num_nodes, dtype=jnp.float32)
    one_hot = (batch[None, :] == jnp.arange(num_graphs)[:, None]).astype(jnp.float32)
    counts = jnp.maximum(one_hot.sum(axis=1, keepdims=True), 1.0)
    pool_mat = one_hot / counts                     # [B, N] mean-pool matrix
    return a_hat, pool_mat


# ----------------------------- pure-JAX reference ----------------------------

def gin_reference(x, a_hat, pool_mat, params, use_bf16):
    """use_bf16=False: exact PyTorch-semantics f32 model.
       use_bf16=True : mirrors the kernel's bf16 matmul inputs / f32 accum."""
    cast = (lambda v: v.astype(jnp.bfloat16)) if use_bf16 else (lambda v: v)
    h = x
    for (w1, b1, w2, b2) in params["convs"]:
        z = jnp.dot(cast(a_hat), cast(h), preferred_element_type=jnp.float32)
        z = jnp.dot(cast(z), cast(w1), preferred_element_type=jnp.float32) + b1
        z = jnp.maximum(z, 0.0)
        z = jnp.dot(cast(z), cast(w2), preferred_element_type=jnp.float32) + b2
        h = jnp.maximum(z, 0.0)
        if use_bf16:
            h = h.astype(jnp.bfloat16)
    pooled = jnp.dot(cast(pool_mat), cast(h), preferred_element_type=jnp.float32)
    logits = jnp.dot(cast(pooled), cast(params["fc_w"]),
                     preferred_element_type=jnp.float32) + params["fc_b"]
    return jax.nn.log_softmax(logits, axis=-1)


# ----------------------------- main -------------------------------------------

if __name__ == "__main__":
    num_nodes = 16          # N (all graphs of the batch concatenated)
    num_features = 4        # input node feature dim
    hidden = 32
    num_classes = 3
    num_layers = 4
    num_edges = 40
    num_graphs = 2          # B

    key = jax.random.PRNGKey(0)
    k_x, k_e, k_p = jax.random.split(key, 3)

    x = jax.random.normal(k_x, (num_nodes, num_features), jnp.float32)
    edge_index = jax.random.randint(k_e, (2, num_edges), 0, num_nodes, jnp.int32)
    batch = jnp.concatenate([jnp.zeros(num_nodes // 2, jnp.int32),
                             jnp.ones(num_nodes - num_nodes // 2, jnp.int32)])

    params = init_params(k_p, num_features, hidden, num_classes, num_layers)
    a_hat, pool_mat = build_dense_graph(edge_index, batch, num_nodes, num_graphs)

    out = gin_forward(x, a_hat, pool_mat, params)
    out = jax.block_until_ready(out)
    assert out.shape == (num_graphs, num_classes)

    # Tight check against a pure-JAX model that uses the same bf16 MXU inputs.
    ref_mixed = gin_reference(x, a_hat, pool_mat, params, use_bf16=True)
    assert jnp.allclose(out, ref_mixed, rtol=2e-3, atol=2e-3), (out, ref_mixed)

    # Semantics check vs. the full-f32 PyTorch-equivalent reference (looser
    # tolerance accounts for bf16 matmul inputs / bf16 inter-layer activations).
    ref_f32 = gin_reference(x, a_hat, pool_mat, params, use_bf16=False)
    assert jnp.allclose(out, ref_f32, rtol=5e-2, atol=5e-2), (out, ref_f32)

    print("KERNEL_OK")
</pallas_src>

<mosaic_0001>
module attributes {stable_mosaic.version = 11 : i64} {
  func.func @_gin_fused_kernel(%arg0: i32, %arg1: i32, %arg2: memref<128x128xbf16, #tpu.memory_space<vmem>>, %arg3: memref<128x128xbf16, #tpu.memory_space<vmem>>, %arg4: memref<1x2x128x128xbf16, #tpu.memory_space<vmem>>, %arg5: memref<1x2x128xf32, #tpu.memory_space<vmem>>, %arg6: memref<8x128xbf16, #tpu.memory_space<vmem>>, %arg7: memref<128x128xbf16, #tpu.memory_space<vmem>>, %arg8: memref<1x128xf32, #tpu.memory_space<vmem>>, %arg9: memref<8x128xf32, #tpu.memory_space<vmem>>, %arg10: memref<128x128xbf16, #tpu.memory_space<vmem>>, %arg11: memref<128x128xbf16, #tpu.memory_space<vmem>>) attributes {dimension_semantics = [#tpu.dimension_semantics<arbitrary>, #tpu.dimension_semantics<arbitrary>], iteration_bounds = array<i64: 4, 1>, scalar_prefetch = 0 : i64, scratch_operands = 2 : i64, tpu.core_type = #tpu.core_type<tc>, window_params = [{pipeline_mode = #tpu.pipeline_mode<synchronous>, transform_indices = @transform_0, window_bounds = array<i64: 128, 128>}, {pipeline_mode = #tpu.pipeline_mode<synchronous>, transform_indices = @transform_1, window_bounds = array<i64: 128, 128>}, {transform_indices = @transform_2, window_bounds = array<i64: 1, 2, 128, 128>}, {transform_indices = @transform_3, window_bounds = array<i64: 1, 2, 128>}, {pipeline_mode = #tpu.pipeline_mode<synchronous>, transform_indices = @transform_4, window_bounds = array<i64: 8, 128>}, {pipeline_mode = #tpu.pipeline_mode<synchronous>, transform_indices = @transform_5, window_bounds = array<i64: 128, 128>}, {pipeline_mode = #tpu.pipeline_mode<synchronous>, transform_indices = @transform_6, window_bounds = array<i64: 1, 128>}, {pipeline_mode = #tpu.pipeline_mode<synchronous>, transform_indices = @transform_7, window_bounds = array<i64: 8, 128>}]} {
    %c3_i32 = arith.constant 3 : i32
    %0 = arith.cmpi eq, %arg0, %c3_i32 : i32
    %c0_i32 = arith.constant 0 : i32
    %1 = arith.cmpi eq, %arg1, %c0_i32 : i32
    %c0_i32_0 = arith.constant 0 : i32
    %2 = arith.cmpi eq, %arg0, %c0_i32_0 : i32
    %c0_i32_1 = arith.constant 0 : i32
    %3 = arith.cmpi eq, %arg1, %c0_i32_1 : i32
    %4 = arith.andi %2, %3 : i1
    %5 = arith.extui %4 : i1 to i32
    %c0_i32_2 = arith.constant 0 : i32
    %6 = arith.cmpi ne, %5, %c0_i32_2 : i32
    scf.if %6 {
      %c0_25 = arith.constant 0 : index
      %c0_26 = arith.constant 0 : index
      %43 = vector.load %arg3[%c0_25, %c0_26] : memref<128x128xbf16, #tpu.memory_space<vmem>>, vector<128x128xbf16>
      %c0_27 = arith.constant 0 : index
      %c0_28 = arith.constant 0 : index
      %44 = vector.load %arg10[%c0_27, %c0_28] : memref<128x128xbf16, #tpu.memory_space<vmem>>, vector<128x128xbf16>
      tpu.vector_store %arg10[%c0_27, %c0_28], %43 {strides = array<i32>} : memref<128x128xbf16, #tpu.memory_space<vmem>>, vector<128x128xbf16>,
    } else {
    }
    %c128_i32 = arith.constant 128 : i32
    %7 = arith.muli %arg1, %c128_i32 : i32
    %8 = tpu.assume_multiple %7, 128 : i32
    %9 = arith.index_cast %8 : i32 to index
    %c0 = arith.constant 0 : index
    %10 = vector.load %arg2[%9, %c0] : memref<128x128xbf16, #tpu.memory_space<vmem>>, vector<128x128xbf16>
    %c0_3 = arith.constant 0 : index
    %c0_4 = arith.constant 0 : index
    %11 = vector.load %arg10[%c0_3, %c0_4] : memref<128x128xbf16, #tpu.memory_space<vmem>>, vector<128x128xbf16>
    %cst = arith.constant dense<0.000000e+00> : vector<128x128xf32>
    %12 = tpu.matmul %10, %11, %cst {dimension_numbers = #tpu.dot_dimension_numbers<[1], [0], [0], [1], [0, 0, 1, 1], [], []>} : vector<128x128xbf16>, vector<128x128xbf16>, vector<128x128xf32> -> vector<128x128xf32>
    %13 = arith.truncf %12 : vector<128x128xf32> to vector<128x128xbf16>
    %c0_5 = arith.constant 0 : index
    %c0_6 = arith.constant 0 : index
    %c0_7 = arith.constant 0 : index
    %c0_8 = arith.constant 0 : index
    %14 = vector.load %arg4[%c0_5, %c0_6, %c0_7, %c0_8] : memref<1x2x128x128xbf16, #tpu.memory_space<vmem>>, vector<1x1x128x128xbf16>
    %15 = vector.shape_cast %14 : vector<1x1x128x128xbf16> to vector<128x128xbf16>
    %cst_9 = arith.constant dense<0.000000e+00> : vector<128x128xf32>
    %16 = tpu.matmul %13, %15, %cst_9 {dimension_numbers = #tpu.dot_dimension_numbers<[1], [0], [0], [1], [0, 0, 1, 1], [], []>} : vector<128x128xbf16>, vector<128x128xbf16>, vector<128x128xf32> -> vector<128x128xf32>
    %c0_10 = arith.constant 0 : index
    %c0_11 = arith.constant 0 : index
    %c0_12 = arith.constant 0 : index
    %17 = vector.load %arg5[%c0_10, %c0_11, %c0_12] : memref<1x2x128xf32, #tpu.memory_space<vmem>>, vector<1x1x128xf32>
    %18 = vector.shape_cast %17 : vector<1x1x128xf32> to vector<1x128xf32>
    %19 = vector.broadcast %18 : vector<1x128xf32> to vector<128x128xf32>
    %20 = arith.addf %16, %19 : vector<128x128xf32>
    %cst_13 = arith.constant 0.000000e+00 : f32
    %21 = vector.broadcast %cst_13 : f32 to vector<128x128xf32>
    %22 = arith.maximumf %20, %21 : vector<128x128xf32>
    %23 = arith.truncf %22 : vector<128x128xf32> to vector<128x128xbf16>
    %c0_14 = arith.constant 0 : index
    %c1 = arith.constant 1 : index
    %c0_15 = arith.constant 0 : index
    %c0_16 = arith.constant 0 : index
    %24 = vector.load %arg4[%c0_14, %c1, %c0_15, %c0_16] : memref<1x2x128x128xbf16, #tpu.memory_space<vmem>>, vector<1x1x128x128xbf16>
    %25 = vector.shape_cast %24 : vector<1x1x128x128xbf16> to vector<128x128xbf16>
    %cst_17 = arith.constant dense<0.000000e+00> : vector<128x128xf32>
    %26 = tpu.matmul %23, %25, %cst_17 {dimension_numbers = #tpu.dot_dimension_numbers<[1], [0], [0], [1], [0, 0, 1, 1], [], []>} : vector<128x128xbf16>, vector<128x128xbf16>, vector<128x128xf32> -> vector<128x128xf32>
    %c0_18 = arith.constant 0 : index
    %c1_19 = arith.constant 1 : index
    %c0_20 = arith.constant 0 : index
    %27 = vector.load %arg5[%c0_18, %c1_19, %c0_20] : memref<1x2x128xf32, #tpu.memory_space<vmem>>, vector<1x1x128xf32>
    %28 = vector.shape_cast %27 : vector<1x1x128xf32> to vector<1x128xf32>
    %29 = vector.broadcast %28 : vector<1x128xf32> to vector<128x128xf32>
    %30 = arith.addf %26, %29 : vector<128x128xf32>
    %cst_21 = arith.constant 0.000000e+00 : f32
    %31 = vector.broadcast %cst_21 : f32 to vector<128x128xf32>
    %32 = arith.maximumf %30, %31 : vector<128x128xf32>
    %33 = arith.truncf %32 : vector<128x128xf32> to vector<128x128xbf16>
    %34 = arith.index_cast %8 : i32 to index
    %c0_22 = arith.constant 0 : index
    %35 = vector.load %arg11[%34, %c0_22] : memref<128x128xbf16, #tpu.memory_space<vmem>>, vector<128x128xbf16>
    tpu.vector_store %arg11[%34, %c0_22], %33 {strides = array<i32>} : memref<128x128xbf16, #tpu.memory_space<vmem>>, vector<128x128xbf16>,
    %true = arith.constant true
    %36 = arith.xori %0, %true : i1
    %37 = arith.andi %1, %36 : i1
    %38 = arith.extui %37 : i1 to i32
    %c0_i32_23 = arith.constant 0 : i32
    %39 = arith.cmpi ne, %38, %c0_i32_23 : i32
    scf.if %39 {
      %c0_25 = arith.constant 0 : index
      %c0_26 = arith.constant 0 : index
      %43 = vector.load %arg11[%c0_25, %c0_26] : memref<128x128xbf16, #tpu.memory_space<vmem>>, vector<128x128xbf16>
      %c0_27 = arith.constant 0 : index
      %c0_28 = arith.constant 0 : index
      %44 = vector.load %arg10[%c0_27, %c0_28] : memref<128x128xbf16, #tpu.memory_space<vmem>>, vector<128x128xbf16>
      tpu.vector_store %arg10[%c0_27, %c0_28], %43 {strides = array<i32>} : memref<128x128xbf16, #tpu.memory_space<vmem>>, vector<128x128xbf16>,
    } else {
    }
    %40 = arith.andi %0, %1 : i1
    %41 = arith.extui %40 : i1 to i32
    %c0_i32_24 = arith.constant 0 : i32
    %42 = arith.cmpi ne, %41, %c0_i32_24 : i32
    scf.if %42 {
      %c0_25 = arith.constant 0 : index
      %c0_26 = arith.constant 0 : index
      %43 = vector.load %arg6[%c0_25, %c0_26] : memref<8x128xbf16, #tpu.memory_space<vmem>>, vector<8x128xbf16>
      %c0_27 = arith.constant 0 : index
      %c0_28 = arith.constant 0 : index
      %44 = vector.load %arg11[%c0_27, %c0_28] : memref<128x128xbf16, #tpu.memory_space<vmem>>, vector<128x128xbf16>
      %cst_29 = arith.constant dense<0.000000e+00> : vector<8x128xf32>
      %45 = tpu.matmul %43, %44, %cst_29 {dimension_numbers = #tpu.dot_dimension_numbers<[1], [0], [0], [1], [0, 0, 1, 1], [], []>} : vector<8x128xbf16>, vector<128x128xbf16>, vector<8x128xf32> -> vector<8x128xf32>
      %46 = arith.truncf %45 : vector<8x128xf32> to vector<8x128xbf16>
      %c0_30 = arith.constant 0 : index
      %c0_31 = arith.constant 0 : index
      %47 = vector.load %arg7[%c0_30, %c0_31] : memref<128x128xbf16, #tpu.memory_space<vmem>>, vector<128x128xbf16>
      %cst_32 = arith.constant dense<0.000000e+00> : vector<8x128xf32>
      %48 = tpu.matmul %46, %47, %cst_32 {dimension_numbers = #tpu.dot_dimension_numbers<[1], [0], [0], [1], [0, 0, 1, 1], [], []>} : vector<8x128xbf16>, vector<128x128xbf16>, vector<8x128xf32> -> vector<8x128xf32>
      %c0_33 = arith.constant 0 : index
      %c0_34 = arith.constant 0 : index
      %49 = vector.load %arg8[%c0_33, %c0_34] : memref<1x128xf32, #tpu.memory_space<vmem>>, vector<1x128xf32>
      %50 = vector.broadcast %49 : vector<1x128xf32> to vector<8x128xf32>
      %51 = arith.addf %48, %50 : vector<8x128xf32>
      %52 = tpu.iota {dimensions = array<i32: 1>} : vector<8x128xi32>
      %c3_i32_35 = arith.constant 3 : i32
      %53 = vector.broadcast %c3_i32_35 : i32 to vector<8x128xi32>
      %54 = arith.cmpi slt, %52, %53 : vector<8x128xi32>
      %cst_36 = arith.constant -1.000000e+30 : f32
      %55 = vector.broadcast %cst_36 : f32 to vector<8x128xf32>
      %56 = arith.select %54, %51, %55 : vector<8x128xi1>, vector<8x128xf32>
      %cst_37 = arith.constant dense<0xFF800000> : vector<8xf32>
      %57 = vector.multi_reduction <maximumf>, %56, %cst_37 [1] : vector<8x128xf32> to vector<8xf32>
      %58 = vector.shape_cast %57 : vector<8xf32> to vector<8x1xf32>
      %59 = vector.broadcast %58 : vector<8x1xf32> to vector<8x128xf32>
      %60 = arith.subf %56, %59 : vector<8x128xf32>
      %61 = math.exp %60 : vector<8x128xf32>
      %cst_38 = arith.constant dense<0.000000e+00> : vector<8xf32>
      %62 = vector.multi_reduction <add>, %61, %cst_38 [1] : vector<8x128xf32> to vector<8xf32>
      %63 = vector.shape_cast %62 : vector<8xf32> to vector<8x1xf32>
      %64 = math.log %63 : vector<8x1xf32>
      %65 = vector.broadcast %64 : vector<8x1xf32> to vector<8x128xf32>
      %66 = arith.subf %60, %65 : vector<8x128xf32>
      %c0_39 = arith.constant 0 : index
      %c0_40 = arith.constant 0 : index
      %67 = vector.load %arg9[%c0_39, %c0_40] : memref<8x128xf32, #tpu.memory_space<vmem>>, vector<8x128xf32>
      tpu.vector_store %arg9[%c0_39, %c0_40], %66 {strides = array<i32>} : memref<8x128xf32, #tpu.memory_space<vmem>>, vector<8x128xf32>,
    } else {
    }
    return
  }
  func.func @transform_0(%arg0: i32, %arg1: i32) -> (i32, i32) {
    %c0_i32 = arith.constant 0 : i32
    %c0_i32_0 = arith.constant 0 : i32
    %c0_i32_1 = arith.constant 0 : i32
    return %c0_i32, %c0_i32_0 : i32, i32
  }
  func.func @transform_1(%arg0: i32, %arg1: i32) -> (i32, i32) {
    %c0_i32 = arith.constant 0 : i32
    %c0_i32_0 = arith.constant 0 : i32
    %c0_i32_1 = arith.constant 0 : i32
    return %c0_i32, %c0_i32_0 : i32, i32
  }
  func.func @transform_2(%arg0: i32, %arg1: i32) -> (i32, i32, i32, i32) {
    %c0_i32 = arith.constant 0 : i32
    %c0_i32_0 = arith.constant 0 : i32
    %c0_i32_1 = arith.constant 0 : i32
    %c0_i32_2 = arith.constant 0 : i32
    return %arg0, %c0_i32, %c0_i32_0, %c0_i32_1 : i32, i32, i32, i32
  }
  func.func @transform_3(%arg0: i32, %arg1: i32) -> (i32, i32, i32) {
    %c0_i32 = arith.constant 0 : i32
    %c0_i32_0 = arith.constant 0 : i32
    %c0_i32_1 = arith.constant 0 : i32
    return %arg0, %c0_i32, %c0_i32_0 : i32, i32, i32
  }
  func.func @transform_4(%arg0: i32, %arg1: i32) -> (i32, i32) {
    %c0_i32 = arith.constant 0 : i32
    %c0_i32_0 = arith.constant 0 : i32
    %c0_i32_1 = arith.constant 0 : i32
    return %c0_i32, %c0_i32_0 : i32, i32
  }
  func.func @transform_5(%arg0: i32, %arg1: i32) -> (i32, i32) {
    %c0_i32 = arith.constant 0 : i32
    %c0_i32_0 = arith.constant 0 : i32
    %c0_i32_1 = arith.constant 0 : i32
    return %c0_i32, %c0_i32_0 : i32, i32
  }
  func.func @transform_6(%arg0: i32, %arg1: i32) -> (i32, i32) {
    %c0_i32 = arith.constant 0 : i32
    %c0_i32_0 = arith.constant 0 : i32
    %c0_i32_1 = arith.constant 0 : i32
    return %c0_i32, %c0_i32_0 : i32, i32
  }
  func.func @transform_7(%arg0: i32, %arg1: i32) -> (i32, i32) {
    %c0_i32 = arith.constant 0 : i32
    %c0_i32_0 = arith.constant 0 : i32
    %c0_i32_1 = arith.constant 0 : i32
    return %c0_i32, %c0_i32_0 : i32, i32
  }
}

</mosaic_0001>

<llo_original>
// kernel: tpu_custom_call.1
$region0: #{tpu_custom_call.1}
  #allocation0 [shape = 'u32[]', space=smem, size = 0x4, offset = 0x4, fixed_abs, tag = 'smem constant byte address 0x4 - core index']
  #allocation1 [shape = 'u32[72,128]{1,0:T(1,128)}', space=vmem, size = 0x9000, scoped, tag = 'internal scratch']
  #allocation2 [shape = 'bf16[128,128]{1,0:T(8,128)(2,1)}', space=vmem, size = 0x8000, scoped, tag = 'scratch operand']
  #allocation3 [shape = 'bf16[128,128]{1,0:T(8,128)(2,1)}', space=vmem, size = 0x8000, scoped, tag = 'scratch operand']
  %s0 = inlined_call_operand.hbm [shape: bf16[128,128], index: 0, kind: input, shape index: {}]
  %s1 = inlined_call_operand.hbm [shape: bf16[128,128], index: 1, kind: input, shape index: {}]
  %s2 = inlined_call_operand.hbm [shape: bf16[4,2,128,128], index: 2, kind: input, shape index: {}]
  %s3 = inlined_call_operand.hbm [shape: f32[4,2,128], index: 3, kind: input, shape index: {}]
  %s4 = inlined_call_operand.hbm [shape: bf16[8,128], index: 4, kind: input, shape index: {}]
  %s5 = inlined_call_operand.hbm [shape: bf16[128,128], index: 5, kind: input, shape index: {}]
  %s6 = inlined_call_operand.vmem [shape: f32[1,128], index: 6, kind: input, shape index: {}]
  %s7 = inlined_call_operand.hbm [shape: f32[8,128], index: 7, kind: output, shape index: {}]
  %s8 = sld [smem:[#allocation0]]
  $region97: #{tpu_custom_call.1} parent=0
    _
  %s10 = ssub.s32 1, %s8
  %s11 = scalar_select 0, %s10, %s8
  $region1: #{tpu_custom_call.1} parent=0
    #allocation4 [shape = 'u8[32768]{0}', space=vmem, size = 0x8000, scoped, tag = 'input window, operand 0, single buffered']
    #allocation5 [shape = 's32[2]{0}', space=sflag, size = 0x8, scoped, tag = 'scoped memory for tpu_custom_call.1']
    #allocation6 [shape = 's32[2]{0}', space=sflag, size = 0x8, scoped, tag = 'scoped memory for tpu_custom_call.1']
    #allocation7 [shape = 'u8[32768]{0}', space=vmem, size = 0x8000, scoped, tag = 'input window, operand 1, single buffered']
    #allocation8 [shape = 's32[1]{0}', space=sflag, size = 0x4, scoped, tag = 'scoped memory for tpu_custom_call.1']
    #allocation9 [shape = 'u8[131072]{0}', space=vmem, size = 0x20000, scoped, tag = 'input window, operand 2']
    #allocation10 [shape = 'u8[2048]{0}', space=vmem, size = 0x800, scoped, tag = 'input window, operand 3']
    #allocation11 [shape = 'u8[2048]{0}', space=vmem, size = 0x800, scoped, tag = 'input window, operand 4, single buffered']
    #allocation12 [shape = 'u8[32768]{0}', space=vmem, size = 0x8000, scoped, tag = 'input window, operand 5, single buffered']
    #allocation13 [shape = 's32[1]{0}', space=sflag, size = 0x4, scoped, tag = 'scoped memory for tpu_custom_call.1']
    #allocation14 [shape = 'u8[4096]{0}', space=vmem, size = 0x1000, scoped, tag = 'output window, operand 0, single buffered']
    %12 = vsyncpa [#allocation5], 0
    %13 = vsyncpa [#allocation8], 0
    %14 = vsyncpa [#allocation13], 0
    %15 = vsyncpa [#allocation6], 0
    loop: start=0, step=1, limit=6
    $region2: #{tpu_custom_call.1} parent=1 // loop_pre_header
      _
    $region3: #{tpu_custom_call.1} parent=1 // loop_header
      %s17 = sphi 0, %s21
      %p18 = scmp.ge.s32.totalorder %s17, 6
      %s24 = sphi 0, %s36
      %s25 = sphi 0, %s32
      %s26 = sphi 0, %s24
      %s27 = sphi 0, %s25
      %s28 = sphi 0, %s26
      %s29 = sphi 0, %s27
      %s37 = sphi 0, %s37
      %s39 = sphi 0, %s37
      %s40 = sphi 0, %s39
      %s54 = sphi 0, %s40
      %s58 = sphi 0, %s58
      %s60 = sphi 0, %s58
      %s61 = sphi 0, %s60
      %s75 = sphi 0, %s61
      %s81 = sphi 0, %s83
      %s84 = sphi 0, %s81
      %s85 = sphi 0, %s84
      %s101 = sphi 0, %s85
      %s107 = sphi 0, %s109
      %s110 = sphi 0, %s107
      %s111 = sphi 0, %s110
      %s127 = sphi 0, %s111
      %s131 = sphi 0, %s131
      %s133 = sphi 0, %s131
      %s134 = sphi 0, %s133
      %s148 = sphi 0, %s134
      %s152 = sphi 0, %s152
      %s154 = sphi 0, %s152
      %s155 = sphi 0, %s154
      %s169 = sphi 0, %s155
      %s173 = sphi 0, %s173
      %s175 = sphi 0, %s173
      %s176 = sphi 0, %s175
      %s190 = sphi 0, %s176
      %s194 = sphi 0, %s194
      %s196 = sphi 0, %s194
      %s197 = sphi 0, %s196
      %s211 = sphi 0, %s197
    $region4: #{tpu_custom_call.1} parent=1 // loop_header_branch
      %20 = sbr.rel (%p18) target = $region8
    $region5: #{tpu_custom_call.1} parent=1 // loop_body
      %s22 = ssub.s32 %s17, 1
      %s23 = ssub.s32 %s17, 2
      %s30 = sadd.s32 1, %s25
      %p31 = scmp.ge.s32.totalorder %s30, 1
      %s32 = scalar_select %p31, 0, %s30
      %s33 = sadd.s32 1, %s24
      %s34 = scalar_select %p31, %s33, %s24
      %p35 = scmp.ge.s32.totalorder %s34, 4
      %s36 = scalar_select %p35, 0, %s34
      %s38 = sadd.s32 %s37, 1
      %p41 = scmp.eq.s32.totalorder %s17, 3
      %p42 = scmp.ne.s32.totalorder %s37, %s39
      %p43 = scmp.eq.s32.totalorder %s17, 0
      %p44 = por %p42, %p43
      %p45 = scmp.ne.s32.totalorder %s37, %s39
      %p46 = scmp.eq.s32.totalorder %s22, 3
      %p47 = por %p45, %p46
      %p48 = scmp.ne.s32.totalorder %s39, %s40
      %p49 = scmp.eq.s32.totalorder %s22, 0
      %p50 = por %p48, %p49
      %p51 = scmp.ne.s32.totalorder %s39, %s40
      %p52 = scmp.eq.s32.totalorder %s23, 3
      %p53 = por %p51, %p52
      %p55 = scmp.ne.s32.totalorder %s40, %s54
      %p56 = scmp.eq.s32.totalorder %s23, 0
      %p57 = por %p55, %p56
      %s59 = sadd.s32 %s58, 1
      %p62 = scmp.eq.s32.totalorder %s17, 3
      %p63 = scmp.ne.s32.totalorder %s58, %s60
      %p64 = scmp.eq.s32.totalorder %s17, 0
      %p65 = por %p63, %p64
      %p66 = scmp.ne.s32.totalorder %s58, %s60
      %p67 = scmp.eq.s32.totalorder %s22, 3
      %p68 = por %p66, %p67
      %p69 = scmp.ne.s32.totalorder %s60, %s61
      %p70 = scmp.eq.s32.totalorder %s22, 0
      %p71 = por %p69, %p70
      %p72 = scmp.ne.s32.totalorder %s60, %s61
      %p73 = scmp.eq.s32.totalorder %s23, 3
      %p74 = por %p72, %p73
      %p76 = scmp.ne.s32.totalorder %s61, %s75
      %p77 = scmp.eq.s32.totalorder %s23, 0
      %p78 = por %p76, %p77
      %s79 = ssub.s32 %s24, %s36
      %p80 = scmp.eq.s32.totalorder %s79, 0
      %s82 = sadd.s32 %s81, 1
      %s83 = scalar_select %p80, %s81, %s82
      %p86 = pneg %p80
      %p87 = scmp.eq.s32.totalorder %s17, 3
      %p88 = por %p86, %p87
      %p89 = scmp.ne.s32.totalorder %s81, %s84
      %p90 = scmp.eq.s32.totalorder %s17, 0
      %p91 = por %p89, %p90
      %p92 = scmp.ne.s32.totalorder %s81, %s84
      %p93 = scmp.eq.s32.totalorder %s22, 3
      %p94 = por %p92, %p93
      %p95 = scmp.ne.s32.totalorder %s84, %s85
      %p96 = scmp.eq.s32.totalorder %s22, 0
      %p97 = por %p95, %p96
      %p98 = scmp.ne.s32.totalorder %s84, %s85
      %p99 = scmp.eq.s32.totalorder %s23, 3
      %p100 = por %p98, %p99
      %p102 = scmp.ne.s32.totalorder %s85, %s101
      %p103 = scmp.eq.s32.totalorder %s23, 0
      %p104 = por %p102, %p103
      %s105 = ssub.s32 %s24, %s36
      %p106 = scmp.eq.s32.totalorder %s105, 0
      %s108 = sadd.s32 %s107, 1
      %s109 = scalar_select %p106, %s107, %s108
      %p112 = pneg %p106
      %p113 = scmp.eq.s32.totalorder %s17, 3
      %p114 = por %p112, %p113
      %p115 = scmp.ne.s32.totalorder %s107, %s110
      %p116 = scmp.eq.s32.totalorder %s17, 0
      %p117 = por %p115, %p116
      %p118 = scmp.ne.s32.totalorder %s107, %s110
      %p119 = scmp.eq.s32.totalorder %s22, 3
      %p120 = por %p118, %p119
      %p121 = scmp.ne.s32.totalorder %s110, %s111
      %p122 = scmp.eq.s32.totalorder %s22, 0
      %p123 = por %p121, %p122
      %p124 = scmp.ne.s32.totalorder %s110, %s111
      %p125 = scmp.eq.s32.totalorder %s23, 3
      %p126 = por %p124, %p125
      %p128 = scmp.ne.s32.totalorder %s111, %s127
      %p129 = scmp.eq.s32.totalorder %s23, 0
      %p130 = por %p128, %p129
      %s132 = sadd.s32 %s131, 1
      %p135 = scmp.eq.s32.totalorder %s17, 3
      %p136 = scmp.ne.s32.totalorder %s131, %s133
      %p137 = scmp.eq.s32.totalorder %s17, 0
      %p138 = por %p136, %p137
      %p139 = scmp.ne.s32.totalorder %s131, %s133
      %p140 = scmp.eq.s32.totalorder %s22, 3
      %p141 = por %p139, %p140
      %p142 = scmp.ne.s32.totalorder %s133, %s134
      %p143 = scmp.eq.s32.totalorder %s22, 0
      %p144 = por %p142, %p143
      %p145 = scmp.ne.s32.totalorder %s133, %s134
      %p146 = scmp.eq.s32.totalorder %s23, 3
      %p147 = por %p145, %p146
      %p149 = scmp.ne.s32.totalorder %s134, %s148
      %p150 = scmp.eq.s32.totalorder %s23, 0
      %p151 = por %p149, %p150
      %s153 = sadd.s32 %s152, 1
      %p156 = scmp.eq.s32.totalorder %s17, 3
      %p157 = scmp.ne.s32.totalorder %s152, %s154
      %p158 = scmp.eq.s32.totalorder %s17, 0
      %p159 = por %p157, %p158
      %p160 = scmp.ne.s32.totalorder %s152, %s154
      %p161 = scmp.eq.s32.totalorder %s22, 3
      %p162 = por %p160, %p161
      %p163 = scmp.ne.s32.totalorder %s154, %s155
      %p164 = scmp.eq.s32.totalorder %s22, 0
      %p165 = por %p163, %p164
      %p166 = scmp.ne.s32.totalorder %s154, %s155
      %p167 = scmp.eq.s32.totalorder %s23, 3
      %p168 = por %p166, %p167
      %p170 = scmp.ne.s32.totalorder %s155, %s169
      %p171 = scmp.eq.s32.totalorder %s23, 0
      %p172 = por %p170, %p171
      %s174 = sadd.s32 %s173, 1
      %p177 = scmp.eq.s32.totalorder %s17, 3
      %p178 = scmp.ne.s32.totalorder %s173, %s175
      %p179 = scmp.eq.s32.totalorder %s17, 0
      %p180 = por %p178, %p179
      %p181 = scmp.ne.s32.totalorder %s173, %s175
      %p182 = scmp.eq.s32.totalorder %s22, 3
      %p183 = por %p181, %p182
      %p184 = scmp.ne.s32.totalorder %s175, %s176
      %p185 = scmp.eq.s32.totalorder %s22, 0
      %p186 = por %p184, %p185
      %p187 = scmp.ne.s32.totalorder %s175, %s176
      %p188 = scmp.eq.s32.totalorder %s23, 3
      %p189 = por %p187, %p188
      %p191 = scmp.ne.s32.totalorder %s176, %s190
      %p192 = scmp.eq.s32.totalorder %s23, 0
      %p193 = por %p191, %p192
      %s195 = sadd.s32 %s194, 1
      %p198 = scmp.eq.s32.totalorder %s17, 3
      %p199 = scmp.ne.s32.totalorder %s194, %s196
      %p200 = scmp.eq.s32.totalorder %s17, 0
      %p201 = por %p199, %p200
      %p202 = scmp.ne.s32.totalorder %s194, %s196
      %p203 = scmp.eq.s32.totalorder %s22, 3
      %p204 = por %p202, %p203
      %p205 = scmp.ne.s32.totalorder %s196, %s197
      %p206 = scmp.eq.s32.totalorder %s22, 0
      %p207 = por %p205, %p206
      %p208 = scmp.ne.s32.totalorder %s196, %s197
      %p209 = scmp.eq.s32.totalorder %s23, 3
      %p210 = por %p208, %p209
      %p212 = scmp.ne.s32.totalorder %s197, %s211
      %p213 = scmp.eq.s32.totalorder %s23, 0
      %p214 = por %p212, %p213
      %p215 = scmp.le.s32.totalorder 1, %s17
      %p216 = scmp.lt.s32.totalorder %s17, 5
      %p217 = pnand %p215, %p216
      %p218 = pneg %p217
      // Predicated region
      $region9: #{tpu_custom_call.1} parent=5 // pred_check
        _
      $region10: #{tpu_custom_call.1} parent=5 // pred_check_branch
        %220 = sbr.rel (%p217) target = $region12
      $region11: #{tpu_custom_call.1} parent=5 // pred_region
        %s221 = ssub.s32 %s17, 1
        // Predicated region
        $region13: #{tpu_custom_call.1} parent=11 // pred_check
          %p222 = pneg %p50
        $region14: #{tpu_custom_call.1} parent=11 // pred_check_branch
          %224 = sbr.rel (%p222) target = $region16
        $region15: #{tpu_custom_call.1} parent=11 // pred_region
          %226 = vsyncadd [#allocation5], 0
          %s227 = sshll.u32 %s0, 4
          %s228 = int_to_ptr.hbm [resolvable:$true] %s227
          %s229 = sshll.u32 [#allocation4], 4
          %s230 = int_to_ptr.vmem [resolvable:$true] %s229
          %235 = dma.hbm_to_vmem [thread:$0]  %s228, 1024, %s230, [#allocation5], 64, 64, 4
        $region16: #{tpu_custom_call.1} parent=11 // pred_fallthru
          _
        // Predicated region
        $region17: #{tpu_custom_call.1} parent=11 // pred_check
          %p236 = pneg %p71
        $region18: #{tpu_custom_call.1} parent=11 // pred_check_branch
          %238 = sbr.rel (%p236) target = $region20
        $region19: #{tpu_custom_call.1} parent=11 // pred_region
          %240 = vsyncadd [#allocation8], 0
          %s241 = sshll.u32 %s1, 4
          %s242 = int_to_ptr.hbm [resolvable:$true] %s241
          %s243 = sshll.u32 [#allocation7], 4
          %s244 = int_to_ptr.vmem [resolvable:$true] %s243
          %249 = dma.hbm_to_vmem [thread:$0]  %s242, 1024, %s244, [#allocation8], 64, 64, 4
        $region20: #{tpu_custom_call.1} parent=11 // pred_fallthru
          _
        // Predicated region
        $region21: #{tpu_custom_call.1} parent=11 // pred_check
          %p250 = pneg %p144
        $region22: #{tpu_custom_call.1} parent=11 // pred_check_branch
          %252 = sbr.rel (%p250) target = $region24
        $region23: #{tpu_custom_call.1} parent=11 // pred_region
          %254 = vsyncadd [#allocation8], 0
          %s256 = sshll.u32 %s4, 4
          %s257 = int_to_ptr.hbm [resolvable:$true] %s256
          %s258 = sshll.u32 [#allocation11], 4
          %s259 = int_to_ptr.vmem [resolvable:$true] %s258
          %261 = dma.hbm_to_vmem [thread:$0]  %s257, 64, %s259, [#allocation8]
        $region24: #{tpu_custom_call.1} parent=11 // pred_fallthru
          _
        // Predicated region
        $region25: #{tpu_custom_call.1} parent=11 // pred_check
          %p262 = pneg %p165
        $region26: #{tpu_custom_call.1} parent=11 // pred_check_branch
          %264 = sbr.rel (%p262) target = $region28
        $region27: #{tpu_custom_call.1} parent=11 // pred_region
          %266 = vsyncadd [#allocation13], 0
          %s267 = sshll.u32 %s5, 4
          %s268 = int_to_ptr.hbm [resolvable:$true] %s267
          %s269 = sshll.u32 [#allocation12], 4
          %s270 = int_to_ptr.vmem [resolvable:$true] %s269
          %275 = dma.hbm_to_vmem [thread:$0]  %s268, 1024, %s270, [#allocation13], 64, 64, 4
        $region28: #{tpu_custom_call.1} parent=11 // pred_fallthru
          _
        // Predicated region
        $region29: #{tpu_custom_call.1} parent=11 // pred_check
          %p276 = pneg %p186
        $region30: #{tpu_custom_call.1} parent=11 // pred_check_branch
          %278 = sbr.rel (%p276) target = $region32
        $region31: #{tpu_custom_call.1} parent=11 // pred_region
          _
        $region32: #{tpu_custom_call.1} parent=11 // pred_fallthru
          _
      $region12: #{tpu_custom_call.1} parent=5 // pred_fallthru
        _
      %p279 = scmp.lt.s32.totalorder %s17, 4
      // Predicated region
      $region33: #{tpu_custom_call.1} parent=5 // pred_check
        %p280 = pneg %p279
      $region34: #{tpu_custom_call.1} parent=5 // pred_check_branch
        %282 = sbr.rel (%p280) target = $region36
      $region35: #{tpu_custom_call.1} parent=5 // pred_region
        // Predicated region
        $region37: #{tpu_custom_call.1} parent=35 // pred_check
          %p283 = pneg %p91
        $region38: #{tpu_custom_call.1} parent=35 // pred_check_branch
          %285 = sbr.rel (%p283) target = $region40
        $region39: #{tpu_custom_call.1} parent=35 // pred_region
          %s286 = sand.u32 %s17, 1
          %s287 = scalar_lea.sflag [#allocation5], %s286
          %s288 = sand.u32 %s81, 1
          %s289 = smul.addr %s288, 128
          %s290 = scalar_lea.vmem [#allocation9], %s289
          %292 = vsyncadd %s287, 0
          %s293 = smul.addr %s24, 32
          %s294 = smul.addr %s293, 4
          %s295 = scalar_lea.hbm %s2, %s294
          %s296 = sshll.u32 %s295, 4
          %s297 = int_to_ptr.hbm [resolvable:$true] %s296
          %s298 = sshll.u32 %s290, 4
          %s299 = int_to_ptr.vmem [resolvable:$true] %s298
          %304 = dma.hbm_to_vmem [thread:$0]  %s297, 2048, %s299, %s287, 64, 64, 4
        $region40: #{tpu_custom_call.1} parent=35 // pred_fallthru
          _
        // Predicated region
        $region41: #{tpu_custom_call.1} parent=35 // pred_check
          %p305 = pneg %p117
        $region42: #{tpu_custom_call.1} parent=35 // pred_check_branch
          %307 = sbr.rel (%p305) target = $region44
        $region43: #{tpu_custom_call.1} parent=35 // pred_region
          %s308 = sand.u32 %s17, 1
          %s309 = scalar_lea.sflag [#allocation5], %s308
          %s310 = sand.u32 %s107, 1
          %s311 = smul.addr %s310, 2
          %s312 = scalar_lea.vmem [#allocation10], %s311
          %314 = vsyncadd %s309, 0
          %s315 = smul.addr %s24, 2
          %s316 = scalar_lea.hbm %s3, %s315
          %s318 = sshll.u32 %s316, 4
          %s319 = int_to_ptr.hbm [resolvable:$true] %s318
          %s320 = sshll.u32 %s312, 4
          %s321 = int_to_ptr.vmem [resolvable:$true] %s320
          %323 = dma.hbm_to_vmem [thread:$0]  %s319, 32, %s321, %s309
        $region44: #{tpu_custom_call.1} parent=35 // pred_fallthru
          _
      $region36: #{tpu_custom_call.1} parent=5 // pred_fallthru
        _
      %p324 = scmp.le.s32.totalorder 1, %s17
      %p325 = scmp.lt.s32.totalorder %s17, 5
      %p326 = pnand %p324, %p325
      %p327 = pneg %p326
      // Predicated region
      $region45: #{tpu_custom_call.1} parent=5 // pred_check
        _
      $region46: #{tpu_custom_call.1} parent=5 // pred_check_branch
        %329 = sbr.rel (%p326) target = $region48
      $region47: #{tpu_custom_call.1} parent=5 // pred_region
        %s330 = ssub.s32 %s17, 1
        // Predicated region
        $region49: #{tpu_custom_call.1} parent=47 // pred_check
          %p331 = pneg %p50
        $region50: #{tpu_custom_call.1} parent=47 // pred_check_branch
          %333 = sbr.rel (%p331) target = $region52
        $region51: #{tpu_custom_call.1} parent=47 // pred_region
          %335 = dma.done [#allocation5], 1024
        $region52: #{tpu_custom_call.1} parent=47 // pred_fallthru
          _
        // Predicated region
        $region53: #{tpu_custom_call.1} parent=47 // pred_check
          %p336 = pneg %p71
        $region54: #{tpu_custom_call.1} parent=47 // pred_check_branch
          %338 = sbr.rel (%p336) target = $region56
        $region55: #{tpu_custom_call.1} parent=47 // pred_region
          %340 = dma.done [#allocation8], 1024
        $region56: #{tpu_custom_call.1} parent=47 // pred_fallthru
          _
        %s341 = sand.u32 %s22, 1
        %s342 = scalar_lea.sflag [#allocation5], %s341
        %s343 = sand.u32 %s84, 1
        %s344 = smul.addr %s343, 128
        %s345 = scalar_lea.vmem [#allocation9], %s344
        // Predicated region
        $region57: #{tpu_custom_call.1} parent=47 // pred_check
          %p346 = pneg %p97
        $region58: #{tpu_custom_call.1} parent=47 // pred_check_branch
          %348 = sbr.rel (%p346) target = $region60
        $region59: #{tpu_custom_call.1} parent=47 // pred_region
          %350 = dma.done %s342, 2048
        $region60: #{tpu_custom_call.1} parent=47 // pred_fallthru
          _
        %s351 = sand.u32 %s22, 1
        %s352 = scalar_lea.sflag [#allocation5], %s351
        %s353 = sand.u32 %s110, 1
        %s354 = smul.addr %s353, 2
        %s355 = scalar_lea.vmem [#allocation10], %s354
        // Predicated region
        $region61: #{tpu_custom_call.1} parent=47 // pred_check
          %p356 = pneg %p123
        $region62: #{tpu_custom_call.1} parent=47 // pred_check_branch
          %358 = sbr.rel (%p356) target = $region64
        $region63: #{tpu_custom_call.1} parent=47 // pred_region
          %360 = dma.done %s352, 32
        $region64: #{tpu_custom_call.1} parent=47 // pred_fallthru
          _
        // Predicated region
        $region65: #{tpu_custom_call.1} parent=47 // pred_check
          %p361 = pneg %p144
        $region66: #{tpu_custom_call.1} parent=47 // pred_check_branch
          %363 = sbr.rel (%p361) target = $region68
        $region67: #{tpu_custom_call.1} parent=47 // pred_region
          %365 = dma.done [#allocation8], 64
        $region68: #{tpu_custom_call.1} parent=47 // pred_fallthru
          _
        // Predicated region
        $region69: #{tpu_custom_call.1} parent=47 // pred_check
          %p366 = pneg %p165
        $region70: #{tpu_custom_call.1} parent=47 // pred_check_branch
          %368 = sbr.rel (%p366) target = $region72
        $region71: #{tpu_custom_call.1} parent=47 // pred_region
          %370 = dma.done [#allocation13], 1024
        $region72: #{tpu_custom_call.1} parent=47 // pred_fallthru
          _
        %p371 = pneg %p50
        %p372 = pneg %p47
        %p373 = pneg %p71
        %p374 = pneg %p68
        %s375 = sand.u32 %s22, 1
        %s376 = scalar_lea.sflag [#allocation5], %s375
        %s377 = sand.u32 %s84, 1
        %s378 = smul.addr %s377, 128
        %s379 = scalar_lea.vmem [#allocation9], %s378
        %p380 = pneg %p97
        %p381 = pneg %p94
        %s382 = sand.u32 %s22, 1
        %s383 = scalar_lea.sflag [#allocation5], %s382
        %s384 = sand.u32 %s110, 1
        %s385 = smul.addr %s384, 2
        %s386 = scalar_lea.vmem [#allocation10], %s385
        %p387 = pneg %p123
        %p388 = pneg %p120
        %p389 = pneg %p144
        %p390 = pneg %p141
        %p391 = pneg %p165
        %p392 = pneg %p162
        %p393 = pneg %p186
        %p394 = pneg %p183
        %p395 = pneg %p207
        %p396 = pneg %p204
        %p397 = scmp.eq.s32.totalorder %s26, 3
        %p398 = scmp.eq.s32.totalorder %s27, 0
        %p399 = scmp.eq.s32.totalorder %s26, 0
        %p400 = pnand %p399, %p398
        %p401 = pneg %p400
        // Predicated region
        $region73: #{tpu_custom_call.1} parent=47 // pred_check
          _
        $region74: #{tpu_custom_call.1} parent=47 // pred_check_branch
          %403 = sbr.rel (%p400) target = $region76
        $region75: #{tpu_custom_call.1} parent=47 // pred_region
          %v404 = vld [vmem:[#allocation7] sm:$0xf]
          %v405 = vld [vmem:[#allocation7 + $0x4] sm:$0xf]
          %v406 = vld [vmem:[#allocation7 + $0x8] sm:$0xf]
          %v407 = vld [vmem:[#allocation7 + $0xc] sm:$0xf]
          %v408 = vld [vmem:[#allocation7 + $0x10] sm:$0xf]
          %v409 = vld [vmem:[#allocation7 + $0x14] sm:$0xf]
          %v410 = vld [vmem:[#allocation7 + $0x18] sm:$0xf]
          %v411 = vld [vmem:[#allocation7 + $0x1c] sm:$0xf]
          %v412 = vld [vmem:[#allocation7 + $0x20] sm:$0xf]
          %v413 = vld [vmem:[#allocation7 + $0x24] sm:$0xf]
          %v414 = vld [vmem:[#allocation7 + $0x28] sm:$0xf]
          %v415 = vld [vmem:[#allocation7 + $0x2c] sm:$0xf]
          %v416 = vld [vmem:[#allocation7 + $0x30] sm:$0xf]
          %v417 = vld [vmem:[#allocation7 + $0x34] sm:$0xf]
          %v418 = vld [vmem:[#allocation7 + $0x38] sm:$0xf]
          %v419 = vld [vmem:[#allocation7 + $0x3c] sm:$0xf]
          %420 = vst [vmem:[#allocation2] sm:$0xf] %v404
          %421 = vst [vmem:[#allocation2 + $0x4] sm:$0xf] %v405
          %422 = vst [vmem:[#allocation2 + $0x8] sm:$0xf] %v406
          %423 = vst [vmem:[#allocation2 + $0xc] sm:$0xf] %v407
          %424 = vst [vmem:[#allocation2 + $0x10] sm:$0xf] %v408
          %425 = vst [vmem:[#allocation2 + $0x14] sm:$0xf] %v409
          %426 = vst [vmem:[#allocation2 + $0x18] sm:$0xf] %v410
          %427 = vst [vmem:[#allocation2 + $0x1c] sm:$0xf] %v411
          %428 = vst [vmem:[#allocation2 + $0x20] sm:$0xf] %v412
          %429 = vst [vmem:[#allocation2 + $0x24] sm:$0xf] %v413
          %430 = vst [vmem:[#allocation2 + $0x28] sm:$0xf] %v414
          %431 = vst [vmem:[#allocation2 + $0x2c] sm:$0xf] %v415
          %432 = vst [vmem:[#allocation2 + $0x30] sm:$0xf] %v416
          %433 = vst [vmem:[#allocation2 + $0x34] sm:$0xf] %v417
          %434 = vst [vmem:[#allocation2 + $0x38] sm:$0xf] %v418
          %435 = vst [vmem:[#allocation2 + $0x3c] sm:$0xf] %v419
        $region76: #{tpu_custom_call.1} parent=47 // pred_fallthru
          _
        %s436 = smul.u32 %s27, 128
        %s437 = sshra.s32 %s436, 3
        %s438 = sand.u32 %s436, 7
        %s439 = smul.addr %s437, 4
        %s440 = scalar_lea.vmem [#allocation4], %s439
        %v441 = vld [vmem:[%s440] sm:$0xf]
        %v442 = vld [vmem:[%s440 + $0x4] sm:$0xf]
        %v443 = vld [vmem:[%s440 + $0x8] sm:$0xf]
        %v444 = vld [vmem:[%s440 + $0xc] sm:$0xf]
        %v445 = vld [vmem:[%s440 + $0x10] sm:$0xf]
        %v446 = vld [vmem:[%s440 + $0x14] sm:$0xf]
        %v447 = vld [vmem:[%s440 + $0x18] sm:$0xf]
        %v448 = vld [vmem:[%s440 + $0x1c] sm:$0xf]
        %v449 = vld [vmem:[%s440 + $0x20] sm:$0xf]
        %v450 = vld [vmem:[%s440 + $0x24] sm:$0xf]
        %v451 = vld [vmem:[%s440 + $0x28] sm:$0xf]
        %v452 = vld [vmem:[%s440 + $0x2c] sm:$0xf]
        %v453 = vld [vmem:[%s440 + $0x30] sm:$0xf]
        %v454 = vld [vmem:[%s440 + $0x34] sm:$0xf]
        %v455 = vld [vmem:[%s440 + $0x38] sm:$0xf]
        %v456 = vld [vmem:[%s440 + $0x3c] sm:$0xf]
        %v457 = vld [vmem:[#allocation2] sm:$0xf]
        %v458 = vld [vmem:[#allocation2 + $0x4] sm:$0xf]
        %v459 = vld [vmem:[#allocation2 + $0x8] sm:$0xf]
        %v460 = vld [vmem:[#allocation2 + $0xc] sm:$0xf]
        %v461 = vld [vmem:[#allocation2 + $0x10] sm:$0xf]
        %v462 = vld [vmem:[#allocation2 + $0x14] sm:$0xf]
        %v463 = vld [vmem:[#allocation2 + $0x18] sm:$0xf]
        %v464 = vld [vmem:[#allocation2 + $0x1c] sm:$0xf]
        %v465 = vld [vmem:[#allocation2 + $0x20] sm:$0xf]
        %v466 = vld [vmem:[#allocation2 + $0x24] sm:$0xf]
        %v467 = vld [vmem:[#allocation2 + $0x28] sm:$0xf]
        %v468 = vld [vmem:[#allocation2 + $0x2c] sm:$0xf]
        %v469 = vld [vmem:[#allocation2 + $0x30] sm:$0xf]
        %v470 = vld [vmem:[#allocation2 + $0x34] sm:$0xf]
        %v471 = vld [vmem:[#allocation2 + $0x38] sm:$0xf]
        %v472 = vld [vmem:[#allocation2 + $0x3c] sm:$0xf]
        %v489 = vunpack.c.l.b16 %v441
        %v490 = vunpack.c.l.b16 %v442
        %v491 = vunpack.c.l.b16 %v443
        %v492 = vunpack.c.l.b16 %v444
        %v493 = vunpack.c.l.b16 %v445
        %v494 = vunpack.c.l.b16 %v446
        %v495 = vunpack.c.l.b16 %v447
        %v496 = vunpack.c.l.b16 %v448
        %v497 = vunpack.c.l.b16 %v449
        %v498 = vunpack.c.l.b16 %v450
        %v499 = vunpack.c.l.b16 %v451
        %v500 = vunpack.c.l.b16 %v452
        %v501 = vunpack.c.l.b16 %v453
        %v502 = vunpack.c.l.b16 %v454
        %v503 = vunpack.c.l.b16 %v455
        %v504 = vunpack.c.l.b16 %v456
        %v505 = vpack.c.b16 %v490, %v489
        %v506 = vpack.c.b16 %v492, %v491
        %v507 = vpack.c.b16 %v494, %v493
        %v508 = vpack.c.b16 %v496, %v495
        %v509 = vpack.c.b16 %v498, %v497
        %v510 = vpack.c.b16 %v500, %v499
        %v511 = vpack.c.b16 %v502, %v501
        %v512 = vpack.c.b16 %v504, %v503
        %v537 = vunpack.c.l.b16 %v457
        %v538 = vunpack.c.l.b16 %v458
        %v539 = vunpack.c.l.b16 %v459
        %v540 = vunpack.c.l.b16 %v460
        %v541 = vunpack.c.l.b16 %v461
        %v542 = vunpack.c.l.b16 %v462
        %v543 = vunpack.c.l.b16 %v463
        %v544 = vunpack.c.l.b16 %v464
        %v545 = vunpack.c.l.b16 %v465
        %v546 = vunpack.c.l.b16 %v466
        %v547 = vunpack.c.l.b16 %v467
        %v548 = vunpack.c.l.b16 %v468
        %v549 = vunpack.c.l.b16 %v469
        %v550 = vunpack.c.l.b16 %v470
        %v551 = vunpack.c.l.b16 %v471
        %v552 = vunpack.c.l.b16 %v472
        %v553 = vpack.c.b16 %v538, %v537
        %v554 = vpack.c.b16 %v540, %v539
        %v555 = vpack.c.b16 %v542, %v541
        %v556 = vpack.c.b16 %v544, %v543
        %v557 = vpack.c.b16 %v546, %v545
        %v558 = vpack.c.b16 %v548, %v547
        %v559 = vpack.c.b16 %v550, %v549
        %v560 = vpack.c.b16 %v552, %v551
        %569 = vmatpush.bf16.msra.mxu0 %v560
        %570 = vmatpush.bf16.msra.mxu0 %v559
        %571 = vmatpush.bf16.msra.mxu0 %v558
        %572 = vmatpush.bf16.msra.mxu0 %v557
        %573 = vmatpush.bf16.msra.mxu0 %v556
        %574 = vmatpush.bf16.msra.mxu0 %v555
        %575 = vmatpush.bf16.msra.mxu0 %v554
        %576 = vmatpush.bf16.msra.mxu0 %v553
        %577 = vmatmul.bf16.gmra.mxu0 %v505
        %v578 = vpop.f32.mrf.mxu0
        %v579 = vadd.f32 0.0, %v578
        %v580 = vpop.f32.mrf.mxu0
        %v581 = vadd.f32 0.0, %v580
        %582 = vmatmul.bf16.gmra.mxu0 %v506
        %v583 = vpop.f32.mrf.mxu0
        %v584 = vadd.f32 0.0, %v583
        %v585 = vpop.f32.mrf.mxu0
        %v586 = vadd.f32 0.0, %v585
        %587 = vmatmul.bf16.gmra.mxu0 %v507
        %v588 = vpop.f32.mrf.mxu0
        %v589 = vadd.f32 0.0, %v588
        %v590 = vpop.f32.mrf.mxu0
        %v591 = vadd.f32 0.0, %v590
        %592 = vmatmul.bf16.gmra.mxu0 %v508
        %v593 = vpop.f32.mrf.mxu0
        %v594 = vadd.f32 0.0, %v593
        %v595 = vpop.f32.mrf.mxu0
        %v596 = vadd.f32 0.0, %v595
        %597 = vmatmul.bf16.gmra.mxu0 %v509
        %v598 = vpop.f32.mrf.mxu0
        %v599 = vadd.f32 0.0, %v598
        %v600 = vpop.f32.mrf.mxu0
        %v601 = vadd.f32 0.0, %v600
        %602 = vmatmul.bf16.gmra.mxu0 %v510
        %v603 = vpop.f32.mrf.mxu0
        %v604 = vadd.f32 0.0, %v603
        %v605 = vpop.f32.mrf.mxu0
        %v606 = vadd.f32 0.0, %v605
        %607 = vmatmul.bf16.gmra.mxu0 %v511
        %v608 = vpop.f32.mrf.mxu0
        %v609 = vadd.f32 0.0, %v608
        %v610 = vpop.f32.mrf.mxu0
        %v611 = vadd.f32 0.0, %v610
        %612 = vmatmul.bf16.gmra.mxu0 %v512
        %v613 = vpop.f32.mrf.mxu0
        %v614 = vadd.f32 0.0, %v613
        %v615 = vpop.f32.mrf.mxu0
        %v616 = vadd.f32 0.0, %v615
        %617 = vdwg.mxu0
        %v618 = vpack.c.bf16 %v581, %v579
        %v619 = vpack.c.bf16 %v586, %v584
        %v620 = vpack.c.bf16 %v591, %v589
        %v621 = vpack.c.bf16 %v596, %v594
        %v622 = vpack.c.bf16 %v601, %v599
        %v623 = vpack.c.bf16 %v606, %v604
        %v624 = vpack.c.bf16 %v611, %v609
        %v625 = vpack.c.bf16 %v616, %v614
        %v626 = vld [vmem:[%s345] sm:$0xf]
        %v627 = vld [vmem:[%s345 + $0x4] sm:$0xf]
        %v628 = vld [vmem:[%s345 + $0x8] sm:$0xf]
        %v629 = vld [vmem:[%s345 + $0xc] sm:$0xf]
        %v630 = vld [vmem:[%s345 + $0x10] sm:$0xf]
        %v631 = vld [vmem:[%s345 + $0x14] sm:$0xf]
        %v632 = vld [vmem:[%s345 + $0x18] sm:$0xf]
        %v633 = vld [vmem:[%s345 + $0x1c] sm:$0xf]
        %v634 = vld [vmem:[%s345 + $0x20] sm:$0xf]
        %v635 = vld [vmem:[%s345 + $0x24] sm:$0xf]
        %v636 = vld [vmem:[%s345 + $0x28] sm:$0xf]
        %v637 = vld [vmem:[%s345 + $0x2c] sm:$0xf]
        %v638 = vld [vmem:[%s345 + $0x30] sm:$0xf]
        %v639 = vld [vmem:[%s345 + $0x34] sm:$0xf]
        %v640 = vld [vmem:[%s345 + $0x38] sm:$0xf]
        %v641 = vld [vmem:[%s345 + $0x3c] sm:$0xf]
        %v642 = vld [vmem:[%s355] sm:$0x1]
        %v643 = vperm.slane %v642, 0
        %v660 = vunpack.c.l.b16 %v626
        %v661 = vunpack.c.l.b16 %v627
        %v662 = vunpack.c.l.b16 %v628
        %v663 = vunpack.c.l.b16 %v629
        %v664 = vunpack.c.l.b16 %v630
        %v665 = vunpack.c.l.b16 %v631
        %v666 = vunpack.c.l.b16 %v632
        %v667 = vunpack.c.l.b16 %v633
        %v668 = vunpack.c.l.b16 %v634
        %v669 = vunpack.c.l.b16 %v635
        %v670 = vunpack.c.l.b16 %v636
        %v671 = vunpack.c.l.b16 %v637
        %v672 = vunpack.c.l.b16 %v638
        %v673 = vunpack.c.l.b16 %v639
        %v674 = vunpack.c.l.b16 %v640
        %v675 = vunpack.c.l.b16 %v641
        %v676 = vpack.c.b16 %v661, %v660
        %v677 = vpack.c.b16 %v663, %v662
        %v678 = vpack.c.b16 %v665, %v664
        %v679 = vpack.c.b16 %v667, %v666
        %v680 = vpack.c.b16 %v669, %v668
        %v681 = vpack.c.b16 %v671, %v670
        %v682 = vpack.c.b16 %v673, %v672
        %v683 = vpack.c.b16 %v675, %v674
        %692 = vmatpush.bf16.msra.mxu0 %v683
        %693 = vmatpush.bf16.msra.mxu0 %v682
        %694 = vmatpush.bf16.msra.mxu0 %v681
        %695 = vmatpush.bf16.msra.mxu0 %v680
        %696 = vmatpush.bf16.msra.mxu0 %v679
        %697 = vmatpush.bf16.msra.mxu0 %v678
        %698 = vmatpush.bf16.msra.mxu0 %v677
        %699 = vmatpush.bf16.msra.mxu0 %v676
        %700 = vmatmul.bf16.gmra.mxu0 %v618
        %v701 = vpop.f32.mrf.mxu0
        %v702 = vadd.f32 %v643, %v701
        %v703 = vpop.f32.mrf.mxu0
        %v704 = vadd.f32 %v643, %v703
        %705 = vmatmul.bf16.gmra.mxu0 %v619
        %v706 = vpop.f32.mrf.mxu0
        %v707 = vadd.f32 %v643, %v706
        %v708 = vpop.f32.mrf.mxu0
        %v709 = vadd.f32 %v643, %v708
        %710 = vmatmul.bf16.gmra.mxu0 %v620
        %v711 = vpop.f32.mrf.mxu0
        %v712 = vadd.f32 %v643, %v711
        %v713 = vpop.f32.mrf.mxu0
        %v714 = vadd.f32 %v643, %v713
        %715 = vmatmul.bf16.gmra.mxu0 %v621
        %v716 = vpop.f32.mrf.mxu0
        %v717 = vadd.f32 %v643, %v716
        %v718 = vpop.f32.mrf.mxu0
        %v719 = vadd.f32 %v643, %v718
        %720 = vmatmul.bf16.gmra.mxu0 %v622
        %v721 = vpop.f32.mrf.mxu0
        %v722 = vadd.f32 %v643, %v721
        %v723 = vpop.f32.mrf.mxu0
        %v724 = vadd.f32 %v643, %v723
        %725 = vmatmul.bf16.gmra.mxu0 %v623
        %v726 = vpop.f32.mrf.mxu0
        %v727 = vadd.f32 %v643, %v726
        %v728 = vpop.f32.mrf.mxu0
        %v729 = vadd.f32 %v643, %v728
        %730 = vmatmul.bf16.gmra.mxu0 %v624
        %v731 = vpop.f32.mrf.mxu0
        %v732 = vadd.f32 %v643, %v731
        %v733 = vpop.f32.mrf.mxu0
        %v734 = vadd.f32 %v643, %v733
        %735 = vmatmul.bf16.gmra.mxu0 %v625
        %v736 = vpop.f32.mrf.mxu0
        %v737 = vadd.f32 %v643, %v736
        %v738 = vpop.f32.mrf.mxu0
        %v739 = vadd.f32 %v643, %v738
        %740 = vdwg.mxu0
        %v741 = vmax.f32 %v702, 0.0
        %v742 = vmax.f32 %v704, 0.0
        %v743 = vmax.f32 %v707, 0.0
        %v744 = vmax.f32 %v709, 0.0
        %v745 = vmax.f32 %v712, 0.0
        %v746 = vmax.f32 %v714, 0.0
        %v747 = vmax.f32 %v717, 0.0
        %v748 = vmax.f32 %v719, 0.0
        %v749 = vmax.f32 %v722, 0.0
        %v750 = vmax.f32 %v724, 0.0
        %v751 = vmax.f32 %v727, 0.0
        %v752 = vmax.f32 %v729, 0.0
        %v753 = vmax.f32 %v732, 0.0
        %v754 = vmax.f32 %v734, 0.0
        %v755 = vmax.f32 %v737, 0.0
        %v756 = vmax.f32 %v739, 0.0
        %v757 = vpack.c.bf16 %v742, %v741
        %v758 = vpack.c.bf16 %v744, %v743
        %v759 = vpack.c.bf16 %v746, %v745
        %v760 = vpack.c.bf16 %v748, %v747
        %v761 = vpack.c.bf16 %v750, %v749
        %v762 = vpack.c.bf16 %v752, %v751
        %v763 = vpack.c.bf16 %v754, %v753
        %v764 = vpack.c.bf16 %v756, %v755
        %s765 = scalar_lea.vmem %s345, 64 [#allocation9]
        %v766 = vld [vmem:[%s765] sm:$0xf]
        %v767 = vld [vmem:[%s765 + $0x4] sm:$0xf]
        %v768 = vld [vmem:[%s765 + $0x8] sm:$0xf]
        %v769 = vld [vmem:[%s765 + $0xc] sm:$0xf]
        %v770 = vld [vmem:[%s765 + $0x10] sm:$0xf]
        %v771 = vld [vmem:[%s765 + $0x14] sm:$0xf]
        %v772 = vld [vmem:[%s765 + $0x18] sm:$0xf]
        %v773 = vld [vmem:[%s765 + $0x1c] sm:$0xf]
        %v774 = vld [vmem:[%s765 + $0x20] sm:$0xf]
        %v775 = vld [vmem:[%s765 + $0x24] sm:$0xf]
        %v776 = vld [vmem:[%s765 + $0x28] sm:$0xf]
        %v777 = vld [vmem:[%s765 + $0x2c] sm:$0xf]
        %v778 = vld [vmem:[%s765 + $0x30] sm:$0xf]
        %v779 = vld [vmem:[%s765 + $0x34] sm:$0xf]
        %v780 = vld [vmem:[%s765 + $0x38] sm:$0xf]
        %v781 = vld [vmem:[%s765 + $0x3c] sm:$0xf]
        %v782 = vld [vmem:[%s355 + $0x1] sm:$0x1]
        %v783 = vperm.slane %v782, 0
        %v800 = vunpack.c.l.b16 %v766
        %v801 = vunpack.c.l.b16 %v767
        %v802 = vunpack.c.l.b16 %v768
        %v803 = vunpack.c.l.b16 %v769
        %v804 = vunpack.c.l.b16 %v770
        %v805 = vunpack.c.l.b16 %v771
        %v806 = vunpack.c.l.b16 %v772
        %v807 = vunpack.c.l.b16 %v773
        %v808 = vunpack.c.l.b16 %v774
        %v809 = vunpack.c.l.b16 %v775
        %v810 = vunpack.c.l.b16 %v776
        %v811 = vunpack.c.l.b16 %v777
        %v812 = vunpack.c.l.b16 %v778
        %v813 = vunpack.c.l.b16 %v779
        %v814 = vunpack.c.l.b16 %v780
        %v815 = vunpack.c.l.b16 %v781
        %v816 = vpack.c.b16 %v801, %v800
        %v817 = vpack.c.b16 %v803, %v802
        %v818 = vpack.c.b16 %v805, %v804
        %v819 = vpack.c.b16 %v807, %v806
        %v820 = vpack.c.b16 %v809, %v808
        %v821 = vpack.c.b16 %v811, %v810
        %v822 = vpack.c.b16 %v813, %v812
        %v823 = vpack.c.b16 %v815, %v814
        %832 = vmatpush.bf16.msra.mxu0 %v823
        %833 = vmatpush.bf16.msra.mxu0 %v822
        %834 = vmatpush.bf16.msra.mxu0 %v821
        %835 = vmatpush.bf16.msra.mxu0 %v820
        %836 = vmatpush.bf16.msra.mxu0 %v819
        %837 = vmatpush.bf16.msra.mxu0 %v818
        %838 = vmatpush.bf16.msra.mxu0 %v817
        %839 = vmatpush.bf16.msra.mxu0 %v816
        %840 = vmatmul.bf16.gmra.mxu0 %v757
        %v841 = vpop.f32.mrf.mxu0
        %v842 = vadd.f32 %v783, %v841
        %v843 = vpop.f32.mrf.mxu0
        %v844 = vadd.f32 %v783, %v843
        %845 = vmatmul.bf16.gmra.mxu0 %v758
        %v846 = vpop.f32.mrf.mxu0
        %v847 = vadd.f32 %v783, %v846
        %v848 = vpop.f32.mrf.mxu0
        %v849 = vadd.f32 %v783, %v848
        %850 = vmatmul.bf16.gmra.mxu0 %v759
        %v851 = vpop.f32.mrf.mxu0
        %v852 = vadd.f32 %v783, %v851
        %v853 = vpop.f32.mrf.mxu0
        %v854 = vadd.f32 %v783, %v853
        %855 = vmatmul.bf16.gmra.mxu0 %v760
        %v856 = vpop.f32.mrf.mxu0
        %v857 = vadd.f32 %v783, %v856
        %v858 = vpop.f32.mrf.mxu0
        %v859 = vadd.f32 %v783, %v858
        %860 = vmatmul.bf16.gmra.mxu0 %v761
        %v861 = vpop.f32.mrf.mxu0
        %v862 = vadd.f32 %v783, %v861
        %v863 = vpop.f32.mrf.mxu0
        %v864 = vadd.f32 %v783, %v863
        %865 = vmatmul.bf16.gmra.mxu0 %v762
        %v866 = vpop.f32.mrf.mxu0
        %v867 = vadd.f32 %v783, %v866
        %v868 = vpop.f32.mrf.mxu0
        %v869 = vadd.f32 %v783, %v868
        %870 = vmatmul.bf16.gmra.mxu0 %v763
        %v871 = vpop.f32.mrf.mxu0
        %v872 = vadd.f32 %v783, %v871
        %v873 = vpop.f32.mrf.mxu0
        %v874 = vadd.f32 %v783, %v873
        %875 = vmatmul.bf16.gmra.mxu0 %v764
        %v876 = vpop.f32.mrf.mxu0
        %v877 = vadd.f32 %v783, %v876
        %v878 = vpop.f32.mrf.mxu0
        %v879 = vadd.f32 %v783, %v878
        %880 = vdwg.mxu0
        %v881 = vmax.f32 %v842, 0.0
        %v882 = vmax.f32 %v844, 0.0
        %v883 = vmax.f32 %v847, 0.0
        %v884 = vmax.f32 %v849, 0.0
        %v885 = vmax.f32 %v852, 0.0
        %v886 = vmax.f32 %v854, 0.0
        %v887 = vmax.f32 %v857, 0.0
        %v888 = vmax.f32 %v859, 0.0
        %v889 = vmax.f32 %v862, 0.0
        %v890 = vmax.f32 %v864, 0.0
        %v891 = vmax.f32 %v867, 0.0
        %v892 = vmax.f32 %v869, 0.0
        %v893 = vmax.f32 %v872, 0.0
        %v894 = vmax.f32 %v874, 0.0
        %v895 = vmax.f32 %v877, 0.0
        %v896 = vmax.f32 %v879, 0.0
        %v897 = vpack.c.bf16 %v881, %v881
        %v898 = vpack.c.bf16 %v882, %v882
        %v899 = vpack.c.bf16 %v883, %v883
        %v900 = vpack.c.bf16 %v884, %v884
        %v901 = vpack.c.bf16 %v885, %v885
        %v902 = vpack.c.bf16 %v886, %v886
        %v903 = vpack.c.bf16 %v887, %v887
        %v904 = vpack.c.bf16 %v888, %v888
        %v905 = vpack.c.bf16 %v889, %v889
        %v906 = vpack.c.bf16 %v890, %v890
        %v907 = vpack.c.bf16 %v891, %v891
        %v908 = vpack.c.bf16 %v892, %v892
        %v909 = vpack.c.bf16 %v893, %v893
        %v910 = vpack.c.bf16 %v894, %v894
        %v911 = vpack.c.bf16 %v895, %v895
        %v912 = vpack.c.bf16 %v896, %v896
        %s913 = smul.addr %s437, 4
        %s914 = scalar_lea.vmem [#allocation3], %s913
        %915 = vst [vmem:[%s914] sm:$0xf] %v897
        %916 = vst [vmem:[%s914 + $0x4] sm:$0xf] %v898
        %917 = vst [vmem:[%s914 + $0x8] sm:$0xf] %v899
        %918 = vst [vmem:[%s914 + $0xc] sm:$0xf] %v900
        %919 = vst [vmem:[%s914 + $0x10] sm:$0xf] %v901
        %920 = vst [vmem:[%s914 + $0x14] sm:$0xf] %v902
        %921 = vst [vmem:[%s914 + $0x18] sm:$0xf] %v903
        %922 = vst [vmem:[%s914 + $0x1c] sm:$0xf] %v904
        %923 = vst [vmem:[%s914 + $0x20] sm:$0xf] %v905
        %924 = vst [vmem:[%s914 + $0x24] sm:$0xf] %v906
        %925 = vst [vmem:[%s914 + $0x28] sm:$0xf] %v907
        %926 = vst [vmem:[%s914 + $0x2c] sm:$0xf] %v908
        %927 = vst [vmem:[%s914 + $0x30] sm:$0xf] %v909
        %928 = vst [vmem:[%s914 + $0x34] sm:$0xf] %v910
        %929 = vst [vmem:[%s914 + $0x38] sm:$0xf] %v911
        %930 = vst [vmem:[%s914 + $0x3c] sm:$0xf] %v912
        %p931 = scmp.ne.s32.totalorder %s26, 3
        %p932 = pnand %p398, %p931
        %p933 = pneg %p932
        // Predicated region
        $region77: #{tpu_custom_call.1} parent=47 // pred_check
          _
        $region78: #{tpu_custom_call.1} parent=47 // pred_check_branch
          %935 = sbr.rel (%p932) target = $region80
        $region79: #{tpu_custom_call.1} parent=47 // pred_region
          %v936 = vld [vmem:[#allocation3] sm:$0xf]
          %v937 = vld [vmem:[#allocation3 + $0x4] sm:$0xf]
          %v938 = vld [vmem:[#allocation3 + $0x8] sm:$0xf]
          %v939 = vld [vmem:[#allocation3 + $0xc] sm:$0xf]
          %v940 = vld [vmem:[#allocation3 + $0x10] sm:$0xf]
          %v941 = vld [vmem:[#allocation3 + $0x14] sm:$0xf]
          %v942 = vld [vmem:[#allocation3 + $0x18] sm:$0xf]
          %v943 = vld [vmem:[#allocation3 + $0x1c] sm:$0xf]
          %v944 = vld [vmem:[#allocation3 + $0x20] sm:$0xf]
          %v945 = vld [vmem:[#allocation3 + $0x24] sm:$0xf]
          %v946 = vld [vmem:[#allocation3 + $0x28] sm:$0xf]
          %v947 = vld [vmem:[#allocation3 + $0x2c] sm:$0xf]
          %v948 = vld [vmem:[#allocation3 + $0x30] sm:$0xf]
          %v949 = vld [vmem:[#allocation3 + $0x34] sm:$0xf]
          %v950 = vld [vmem:[#allocation3 + $0x38] sm:$0xf]
          %v951 = vld [vmem:[#allocation3 + $0x3c] sm:$0xf]
          %952 = vst [vmem:[#allocation2] sm:$0xf] %v936
          %953 = vst [vmem:[#allocation2 + $0x4] sm:$0xf] %v937
          %954 = vst [vmem:[#allocation2 + $0x8] sm:$0xf] %v938
          %955 = vst [vmem:[#allocation2 + $0xc] sm:$0xf] %v939
          %956 = vst [vmem:[#allocation2 + $0x10] sm:$0xf] %v940
          %957 = vst [vmem:[#allocation2 + $0x14] sm:$0xf] %v941
          %958 = vst [vmem:[#allocation2 + $0x18] sm:$0xf] %v942
          %959 = vst [vmem:[#allocation2 + $0x1c] sm:$0xf] %v943
          %960 = vst [vmem:[#allocation2 + $0x20] sm:$0xf] %v944
          %961 = vst [vmem:[#allocation2 + $0x24] sm:$0xf] %v945
          %962 = vst [vmem:[#allocation2 + $0x28] sm:$0xf] %v946
          %963 = vst [vmem:[#allocation2 + $0x2c] sm:$0xf] %v947
          %964 = vst [vmem:[#allocation2 + $0x30] sm:$0xf] %v948
          %965 = vst [vmem:[#allocation2 + $0x34] sm:$0xf] %v949
          %966 = vst [vmem:[#allocation2 + $0x38] sm:$0xf] %v950
          %967 = vst [vmem:[#allocation2 + $0x3c] sm:$0xf] %v951
        $region80: #{tpu_custom_call.1} parent=47 // pred_fallthru
          _
        %p968 = pnand %p397, %p398
        %p969 = pneg %p968
        // Predicated region
        $region81: #{tpu_custom_call.1} parent=47 // pred_check
          _
        $region82: #{tpu_custom_call.1} parent=47 // pred_check_branch
          %971 = sbr.rel (%p968) target = $region84
        $region83: #{tpu_custom_call.1} parent=47 // pred_region
          %v972 = vld [vmem:[#allocation11] sm:$0xf]
          %v973 = vld [vmem:[#allocation3] sm:$0xf]
          %v974 = vld [vmem:[#allocation3 + $0x4] sm:$0xf]
          %v975 = vld [vmem:[#allocation3 + $0x8] sm:$0xf]
          %v976 = vld [vmem:[#allocation3 + $0xc] sm:$0xf]
          %v977 = vld [vmem:[#allocation3 + $0x10] sm:$0xf]
          %v978 = vld [vmem:[#allocation3 + $0x14] sm:$0xf]
          %v979 = vld [vmem:[#allocation3 + $0x18] sm:$0xf]
          %v980 = vld [vmem:[#allocation3 + $0x1c] sm:$0xf]
          %v981 = vld [vmem:[#allocation3 + $0x20] sm:$0xf]
          %v982 = vld [vmem:[#allocation3 + $0x24] sm:$0xf]
          %v983 = vld [vmem:[#allocation3 + $0x28] sm:$0xf]
          %v984 = vld [vmem:[#allocation3 + $0x2c] sm:$0xf]
          %v985 = vld [vmem:[#allocation3 + $0x30] sm:$0xf]
          %v986 = vld [vmem:[#allocation3 + $0x34] sm:$0xf]
          %v987 = vld [vmem:[#allocation3 + $0x38] sm:$0xf]
          %v988 = vld [vmem:[#allocation3 + $0x3c] sm:$0xf]
          %v1005 = vunpack.c.l.b16 %v973
          %v1006 = vunpack.c.l.b16 %v974
          %v1007 = vunpack.c.l.b16 %v975
          %v1008 = vunpack.c.l.b16 %v976
          %v1009 = vunpack.c.l.b16 %v977
          %v1010 = vunpack.c.l.b16 %v978
          %v1011 = vunpack.c.l.b16 %v979
          %v1012 = vunpack.c.l.b16 %v980
          %v1013 = vunpack.c.l.b16 %v981
          %v1014 = vunpack.c.l.b16 %v982
          %v1015 = vunpack.c.l.b16 %v983
          %v1016 = vunpack.c.l.b16 %v984
          %v1017 = vunpack.c.l.b16 %v985
          %v1018 = vunpack.c.l.b16 %v986
          %v1019 = vunpack.c.l.b16 %v987
          %v1020 = vunpack.c.l.b16 %v988
          %v1021 = vpack.c.b16 %v1006, %v1005
          %v1022 = vpack.c.b16 %v1008, %v1007
          %v1023 = vpack.c.b16 %v1010, %v1009
          %v1024 = vpack.c.b16 %v1012, %v1011
          %v1025 = vpack.c.b16 %v1014, %v1013
          %v1026 = vpack.c.b16 %v1016, %v1015
          %v1027 = vpack.c.b16 %v1018, %v1017
          %v1028 = vpack.c.b16 %v1020, %v1019
          %1037 = vmatpush.bf16.msra.mxu0 %v1028
          %1038 = vmatpush.bf16.msra.mxu0 %v1027
          %1039 = vmatpush.bf16.msra.mxu0 %v1026
          %1040 = vmatpush.bf16.msra.mxu0 %v1025
          %1041 = vmatpush.bf16.msra.mxu0 %v1024
          %1042 = vmatpush.bf16.msra.mxu0 %v1023
          %1043 = vmatpush.bf16.msra.mxu0 %v1022
          %1044 = vmatpush.bf16.msra.mxu0 %v1021
          %1045 = vmatmul.bf16.gmra.mxu0 %v972
          %v1046 = vpop.f32.mrf.mxu0
          %v1047 = vadd.f32 0.0, %v1046
          %v1048 = vpop.f32.mrf.mxu0
          %1049 = vdwg.mxu0
          %v1050 = vpack.c.bf16 %v1047, %v1047
          %v1051 = vld [vmem:[#allocation12] sm:$0xf]
          %v1052 = vld [vmem:[#allocation12 + $0x4] sm:$0xf]
          %v1053 = vld [vmem:[#allocation12 + $0x8] sm:$0xf]
          %v1054 = vld [vmem:[#allocation12 + $0xc] sm:$0xf]
          %v1055 = vld [vmem:[#allocation12 + $0x10] sm:$0xf]
          %v1056 = vld [vmem:[#allocation12 + $0x14] sm:$0xf]
          %v1057 = vld [vmem:[#allocation12 + $0x18] sm:$0xf]
          %v1058 = vld [vmem:[#allocation12 + $0x1c] sm:$0xf]
          %v1059 = vld [vmem:[#allocation12 + $0x20] sm:$0xf]
          %v1060 = vld [vmem:[#allocation12 + $0x24] sm:$0xf]
          %v1061 = vld [vmem:[#allocation12 + $0x28] sm:$0xf]
          %v1062 = vld [vmem:[#allocation12 + $0x2c] sm:$0xf]
          %v1063 = vld [vmem:[#allocation12 + $0x30] sm:$0xf]
          %v1064 = vld [vmem:[#allocation12 + $0x34] sm:$0xf]
          %v1065 = vld [vmem:[#allocation12 + $0x38] sm:$0xf]
          %v1066 = vld [vmem:[#allocation12 + $0x3c] sm:$0xf]
          %v1067 = vld [vmem:[%s6] sm:$0x1]
          %v1069 = vperm.slane %v1067, 0
          %v1087 = vunpack.c.l.b16 %v1051
          %v1088 = vunpack.c.l.b16 %v1052
          %v1089 = vunpack.c.l.b16 %v1053
          %v1090 = vunpack.c.l.b16 %v1054
          %v1091 = vunpack.c.l.b16 %v1055
          %v1092 = vunpack.c.l.b16 %v1056
          %v1093 = vunpack.c.l.b16 %v1057
          %v1094 = vunpack.c.l.b16 %v1058
          %v1095 = vunpack.c.l.b16 %v1059
          %v1096 = vunpack.c.l.b16 %v1060
          %v1097 = vunpack.c.l.b16 %v1061
          %v1098 = vunpack.c.l.b16 %v1062
          %v1099 = vunpack.c.l.b16 %v1063
          %v1100 = vunpack.c.l.b16 %v1064
          %v1101 = vunpack.c.l.b16 %v1065
          %v1102 = vunpack.c.l.b16 %v1066
          %v1103 = vpack.c.b16 %v1088, %v1087
          %v1104 = vpack.c.b16 %v1090, %v1089
          %v1105 = vpack.c.b16 %v1092, %v1091
          %v1106 = vpack.c.b16 %v1094, %v1093
          %v1107 = vpack.c.b16 %v1096, %v1095
          %v1108 = vpack.c.b16 %v1098, %v1097
          %v1109 = vpack.c.b16 %v1100, %v1099
          %v1110 = vpack.c.b16 %v1102, %v1101
          %1119 = vmatpush.bf16.msra.mxu0 %v1110
          %1120 = vmatpush.bf16.msra.mxu0 %v1109
          %1121 = vmatpush.bf16.msra.mxu0 %v1108
          %1122 = vmatpush.bf16.msra.mxu0 %v1107
          %1123 = vmatpush.bf16.msra.mxu0 %v1106
          %1124 = vmatpush.bf16.msra.mxu0 %v1105
          %1125 = vmatpush.bf16.msra.mxu0 %v1104
          %1126 = vmatpush.bf16.msra.mxu0 %v1103
          %1127 = vmatmul.bf16.gmra.mxu0 %v1050
          %v1128 = vpop.f32.mrf.mxu0
          %v1129 = vadd.f32 %v1069, %v1128
          %v1130 = vpop.f32.mrf.mxu0
          %1131 = vdwg.mxu0
          %v1132 = vlaneseq
          %v1133 = vand.u32 %v1132, 127
          %vm1134 = vcmp.lt.s32.totalorder %v1133, 3
          %v1135 = vsel %vm1134, %v1129, -1e+30
          %1136 = vmax.xlane.f32.xlu0 %v1135
          %v1137 = vpop.xlane.xlu0 %1136
          %v1138 = vsub.f32 %v1135, %v1137
          %v1139 = vmul.f32 %v1138, 1.442695
          %v1140 = vpow.pop %v1139
          %1141 = vadd.xlane.f32.xlu0 %v1140
          %v1142 = vpop.xlane.xlu0 %1141
          %v1143 = vlog2.pop %v1142
          %v1144 = vmul.f32 %v1143, 0.6931472
          %v1145 = vsub.f32 %v1138, %v1144
          %1146 = vst [vmem:[#allocation14] sm:$0xff] %v1145
        $region84: #{tpu_custom_call.1} parent=47 // pred_fallthru
          _
        // Predicated region
        $region85: #{tpu_custom_call.1} parent=47 // pred_check
          %p1147 = pneg %p204
        $region86: #{tpu_custom_call.1} parent=47 // pred_check_branch
          %1149 = sbr.rel (%p1147) target = $region88
        $region87: #{tpu_custom_call.1} parent=47 // pred_region
          %1151 = vsyncadd [#allocation6], 0
          %s1153 = sshll.u32 [#allocation14], 4
          %s1154 = int_to_ptr.vmem [resolvable:$true] %s1153
          %s1155 = sshll.u32 %s7, 4
          %s1156 = int_to_ptr.hbm [resolvable:$true] %s1155
          %1158 = dma.vmem_to_hbm [thread:$0]  %s1154, 128, %s1156, [#allocation6]
        $region88: #{tpu_custom_call.1} parent=47 // pred_fallthru
          _
        // Predicated region
        $region89: #{tpu_custom_call.1} parent=47 // pred_check
          %p1159 = pneg %p204
        $region90: #{tpu_custom_call.1} parent=47 // pred_check_branch
          %1161 = sbr.rel (%p1159) target = $region92
        $region91: #{tpu_custom_call.1} parent=47 // pred_region
          %1163 = dma.done [#allocation6], 128
        $region92: #{tpu_custom_call.1} parent=47 // pred_fallthru
          _
      $region48: #{tpu_custom_call.1} parent=5 // pred_fallthru
        _
      %p1164 = scmp.le.s32.totalorder 2, %s17
      // Predicated region
      $region93: #{tpu_custom_call.1} parent=5 // pred_check
        %p1165 = pneg %p1164
      $region94: #{tpu_custom_call.1} parent=5 // pred_check_branch
        %1167 = sbr.rel (%p1165) target = $region96
      $region95: #{tpu_custom_call.1} parent=5 // pred_region
        %s1168 = ssub.s32 %s17, 2
      $region96: #{tpu_custom_call.1} parent=5 // pred_fallthru
        _
    $region6: #{tpu_custom_call.1} parent=1 // loop_footer
      %s21 = sadd.s32 1, %s17
    $region7: #{tpu_custom_call.1} parent=1 // loop_footer_branch
      %16 = sbr.rel target = $region3
    $region8: #{tpu_custom_call.1} parent=1 // loop_exit
      _
    %1169 = vsyncpa [#allocation5], 1
    %s1170 = scalar_lea.sflag [#allocation5], 1
    %1171 = vsyncpa %s1170, 1
    %1172 = vsyncpa [#allocation8], 1
    %1173 = vsyncpa [#allocation13], 1
    %1174 = vsyncpa [#allocation6], 1
    %s1175 = scalar_lea.sflag [#allocation6], 1
    %1176 = vsyncpa %s1175, 1

</llo_original>
